<compile_context>
chip_gen: v6e
topology: v6e:2x2x1
jax: 0.10.0
libtpu: 0.0.40
codegen_flags: <defaults>
</compile_context>

<pallas_src>
import numpy as np
import jax
import jax.numpy as jnp
from jax.experimental import pallas as pl
from jax.experimental.pallas import tpu as pltpu

LEAK = 0.2
_BF16 = jnp.bfloat16
_F32 = jnp.float32


# ----------------------------------------------------------------------------
# Kernels
# ----------------------------------------------------------------------------
def _generator_kernel(seed_ref, w1g_ref, b1g_ref, w2g_ref, b2g_ref, fake_ref):
    """Generator only: Linear -> ReLU -> Linear -> Tanh (bf16 MXU, f32 elementwise)."""
    h = jnp.dot(seed_ref[...].astype(_BF16), w1g_ref[...],
                preferred_element_type=_F32) + b1g_ref[...]
    h = jnp.maximum(h, 0.0)
    fake = jnp.tanh(jnp.dot(h.astype(_BF16), w2g_ref[...],
                            preferred_element_type=_F32) + b2g_ref[...])
    fake_ref[...] = fake.astype(fake_ref.dtype)


def _wgan_gp_train_kernel(seed_ref, real_ref, alpha_ref,
                          w1g_ref, b1g_ref, w2g_ref, b2g_ref,
                          w1d_ref, b1d_ref, w2d_row_ref, b2d_ref, w1dT_ref,
                          fake_ref, gen_loss_ref, dis_loss_ref,
                          x2_ref):
    B = seed_ref.shape[0]
    seed = seed_ref[...]
    real = real_ref[...]
    alpha = alpha_ref[...]                                            # (B, 1)

    # ---------------- Generator (bf16 matmuls, f32 accumulate) -----------------
    h = jnp.dot(seed.astype(_BF16), w1g_ref[...],
                preferred_element_type=_F32) + b1g_ref[...]
    h = jnp.maximum(h, 0.0)                                           # ReLU
    fake = jnp.tanh(jnp.dot(h.astype(_BF16), w2g_ref[...],
                            preferred_element_type=_F32) + b2g_ref[...])
    fake_ref[...] = fake.astype(fake_ref.dtype)

    # ---------------- Discriminator, fused over [fake; real] -------------------
    # One (2B, Dz) @ (Dz, Dh) matmul instead of separate M=B passes.
    x2_ref[0:B, :] = fake
    x2_ref[B:2 * B, :] = real
    z2 = jnp.dot(x2_ref[...].astype(_BF16), w1d_ref[...],
                 preferred_element_type=_F32) + b1d_ref[...]          # (2B, Dh)
    a2 = jnp.where(z2 > 0, z2, LEAK * z2)                             # LeakyReLU
    w2d_row = w2d_row_ref[...]                                        # (1, Dh) f32
    # N=1 output layer as VPU multiply + lane reduce (an MXU matmul would use
    # 1 of 128+ output columns and waste nearly every vreg lane).
    judge2 = jnp.sum(a2 * w2d_row, axis=-1, keepdims=True) + b2d_ref[...]  # (2B, 1)
    judge_fake = judge2[0:B, :]
    judge_real = judge2[B:2 * B, :]

    # ---------------- Gradient penalty -----------------------------------------
    # Layer 1 is affine, so the pre-activation at the interpolate is exactly the
    # convex combination of the fake/real pre-activations -> no third matmul.
    z_fake = z2[0:B, :]
    z_real = z2[B:2 * B, :]
    z_inter = alpha * z_real + (1.0 - alpha) * z_fake                 # (B, Dh)
    # dD/dx = (leaky'(z) * w2d) @ W1d^T  (closed form for the 2-layer MLP).
    dact = jnp.where(z_inter > 0, 1.0, LEAK)
    gb = dact * w2d_row                                               # (B, Dh)
    g = jnp.dot(gb.astype(_BF16), w1dT_ref[...],
                preferred_element_type=_F32)                          # (B, Dz)
    norm = jnp.sqrt(jnp.sum(g * g, axis=1, keepdims=True))            # (B, 1)
    gp = jnp.mean((norm - 1.0) ** 2)
    # NOTE: the PyTorch spec adds gp with no lambda factor -> keep identical.

    mean_jf = jnp.mean(judge_fake)
    mean_jr = jnp.mean(judge_real)
    gen_loss_ref[0] = -mean_jf
    dis_loss_ref[0] = -mean_jr + mean_jf + gp


# ----------------------------------------------------------------------------
# Wrappers
# ----------------------------------------------------------------------------
def wgan_gp_forward(seed, real, alpha, params):
    """Training-mode forward: returns (gen_loss, dis_loss, fake)."""
    w1g, b1g, w2g, b2g, w1d, b1d, w2d, b2d = params
    B, _ = seed.shape
    dim_z = real.shape[1]

    # One-time layout / dtype prep outside the kernel:
    #  * bf16 matmul weights (halve weight DMA, native MXU dtype on all gens)
    #  * (1, Dh) lane-major row for the N=1 output layer (VPU path, no transpose)
    #  * pre-transposed W1d for the analytic input-gradient matmul
    w1g_k = w1g.astype(_BF16)
    w2g_k = w2g.astype(_BF16)
    w1d_k = w1d.astype(_BF16)
    w1dT_k = w1d.T.astype(_BF16)
    w2d_row = w2d.T.astype(_F32)                                      # (1, dim_h)

    vmem = pl.BlockSpec(memory_space=pltpu.MemorySpace.VMEM)
    smem = pl.BlockSpec(memory_space=pltpu.MemorySpace.SMEM)
    inputs = (seed, real, alpha, w1g_k, b1g, w2g_k, b2g,
              w1d_k, b1d, w2d_row, b2d, w1dT_k)

    out_shape = (
        jax.ShapeDtypeStruct((B, dim_z), jnp.float32),   # fake
        jax.ShapeDtypeStruct((1,), jnp.float32),         # gen_loss (SMEM scalar)
        jax.ShapeDtypeStruct((1,), jnp.float32),         # dis_loss (SMEM scalar)
    )
    # TODO(synk): at realistic batch sizes (B >= a few hundred) add a batch grid
    # (256-512 row blocks, weights resident via index_map -> (0, 0), loss partial
    # sums accumulated in scratch with @pl.when init/finalize, batch axis marked
    # "parallel" so both v7x TensorCores get work), and pad feature dims to 128
    # for lane-dense stores if the real config keeps them lane-sparse.
    fake, gen_loss, dis_loss = pl.pallas_call(
        _wgan_gp_train_kernel,
        out_shape=out_shape,
        in_specs=[vmem] * len(inputs),
        out_specs=(vmem, smem, smem),
        scratch_shapes=[pltpu.VMEM((2 * B, dim_z), jnp.float32)],
    )(*inputs)
    return gen_loss[0], dis_loss[0], fake


def wgan_gp_eval(seed, params):
    """Eval-mode forward: generator only (no discriminator / GP work)."""
    w1g, b1g, w2g, b2g = params[:4]
    B = seed.shape[0]
    dim_z = w2g.shape[1]
    vmem = pl.BlockSpec(memory_space=pltpu.MemorySpace.VMEM)
    return pl.pallas_call(
        _generator_kernel,
        out_shape=jax.ShapeDtypeStruct((B, dim_z), jnp.float32),
        in_specs=[vmem] * 5,
        out_specs=vmem,
    )(seed, w1g.astype(_BF16), b1g, w2g.astype(_BF16), b2g)


def init_params(key, dim_noise, dim_g, dim_z, dim_h):
    """Deterministic PyTorch-style uniform(-1/sqrt(fan_in), 1/sqrt(fan_in)) init."""
    ks = jax.random.split(key, 8)

    def lin(kw, kb, fan_in, fan_out):
        bound = 1.0 / np.sqrt(fan_in)
        w = jax.random.uniform(kw, (fan_in, fan_out), jnp.float32, -bound, bound)
        b = jax.random.uniform(kb, (1, fan_out), jnp.float32, -bound, bound)
        return w, b

    w1g, b1g = lin(ks[0], ks[1], dim_noise, dim_g)
    w2g, b2g = lin(ks[2], ks[3], dim_g, dim_z)
    w1d, b1d = lin(ks[4], ks[5], dim_z, dim_h)
    w2d, b2d = lin(ks[6], ks[7], dim_h, 1)
    return (w1g, b1g, w2g, b2g, w1d, b1d, w2d, b2d)


# ----------------------------------------------------------------------------
# Pure-JAX references
# ----------------------------------------------------------------------------
def _ref_forward_f32(seed, real, alpha, params):
    """f32 reference mirroring the PyTorch module (autograd for the GP gradient)."""
    w1g, b1g, w2g, b2g, w1d, b1d, w2d, b2d = params

    def gen(s):
        h = jnp.maximum(s @ w1g + b1g, 0.0)
        return jnp.tanh(h @ w2g + b2g)

    def disc(x):
        z = x @ w1d + b1d
        a = jnp.where(z > 0, z, LEAK * z)
        return a @ w2d + b2d

    fake = gen(seed)
    judge_fake = disc(fake)
    judge_real = disc(real)
    gen_loss = -jnp.mean(judge_fake)

    inter = alpha * real + (1.0 - alpha) * fake
    g = jax.grad(lambda x: jnp.sum(disc(x)))(inter)
    norm = jnp.sqrt(jnp.sum(g * g, axis=1))
    gp = jnp.mean((norm - 1.0) ** 2)
    dis_loss = -jnp.mean(judge_real) + jnp.mean(judge_fake) + gp
    return gen_loss, dis_loss, fake


def _ref_forward_bf16(seed, real, alpha, params):
    """Reference mirroring the kernel's bf16-matmul / f32-elementwise structure."""
    w1g, b1g, w2g, b2g, w1d, b1d, w2d, b2d = params

    def mm(x, w):
        return jnp.dot(x.astype(_BF16), w.astype(_BF16),
                       preferred_element_type=jnp.float32)

    def gen(s):
        h = jnp.maximum(mm(s, w1g) + b1g, 0.0)
        return jnp.tanh(mm(h, w2g) + b2g)

    w2d_row = w2d.T
    fake = gen(seed)
    z_fake = mm(fake, w1d) + b1d
    z_real = mm(real, w1d) + b1d
    a_fake = jnp.where(z_fake > 0, z_fake, LEAK * z_fake)
    a_real = jnp.where(z_real > 0, z_real, LEAK * z_real)
    judge_fake = jnp.sum(a_fake * w2d_row, axis=-1, keepdims=True) + b2d
    judge_real = jnp.sum(a_real * w2d_row, axis=-1, keepdims=True) + b2d

    z_inter = alpha * z_real + (1.0 - alpha) * z_fake
    dact = jnp.where(z_inter > 0, 1.0, LEAK)
    g = mm(dact * w2d_row, w1d.T)
    norm = jnp.sqrt(jnp.sum(g * g, axis=1, keepdims=True))
    gp = jnp.mean((norm - 1.0) ** 2)

    gen_loss = -jnp.mean(judge_fake)
    dis_loss = -jnp.mean(judge_real) + jnp.mean(judge_fake) + gp
    return gen_loss, dis_loss, fake


# ----------------------------------------------------------------------------
if __name__ == "__main__":
    B, dim_noise, dim_g, dim_z, dim_h = 8, 32, 64, 32, 64

    key = jax.random.PRNGKey(0)
    k_seed, k_real, k_alpha, k_params = jax.random.split(key, 4)

    seed = jax.random.normal(k_seed, (B, dim_noise), jnp.float32)
    real = jax.random.normal(k_real, (B, dim_z), jnp.float32)
    # alpha mirrors torch.rand([bs, 1]) expanded over feature dims
    alpha = jax.random.uniform(k_alpha, (B, 1), jnp.float32)

    params = init_params(k_params, dim_noise, dim_g, dim_z, dim_h)

    gen_loss, dis_loss, fake = jax.block_until_ready(
        wgan_gp_forward(seed, real, alpha, params)
    )
    fake_eval = jax.block_until_ready(wgan_gp_eval(seed, params))

    # Tight check: kernel vs a pure-JAX reference with identical bf16 matmul casts.
    rg, rd, rf = _ref_forward_bf16(seed, real, alpha, params)
    np.testing.assert_allclose(np.asarray(fake), np.asarray(rf), rtol=1e-2, atol=1e-2)
    np.testing.assert_allclose(float(gen_loss), float(rg), rtol=1e-2, atol=1e-2)
    np.testing.assert_allclose(float(dis_loss), float(rd), rtol=1e-2, atol=1e-2)
    np.testing.assert_allclose(np.asarray(fake_eval), np.asarray(rf),
                               rtol=1e-2, atol=1e-2)

    # Loose semantic check: kernel vs full-f32 autograd reference (PyTorch semantics).
    rg32, rd32, rf32 = _ref_forward_f32(seed, real, alpha, params)
    np.testing.assert_allclose(np.asarray(fake), np.asarray(rf32), rtol=5e-2, atol=5e-2)
    np.testing.assert_allclose(float(gen_loss), float(rg32), rtol=5e-2, atol=5e-2)
    np.testing.assert_allclose(float(dis_loss), float(rd32), rtol=5e-2, atol=5e-2)

    print("KERNEL_OK")
</pallas_src>

<mosaic_0001>
module attributes {stable_mosaic.version = 11 : i64} {
  func.func @_wgan_gp_train_kernel(%arg0: memref<8x32xf32, #tpu.memory_space<vmem>>, %arg1: memref<8x32xf32, #tpu.memory_space<vmem>>, %arg2: memref<8x1xf32, #tpu.memory_space<vmem>>, %arg3: memref<32x64xbf16, #tpu.memory_space<vmem>>, %arg4: memref<1x64xf32, #tpu.memory_space<vmem>>, %arg5: memref<64x32xbf16, #tpu.memory_space<vmem>>, %arg6: memref<1x32xf32, #tpu.memory_space<vmem>>, %arg7: memref<32x64xbf16, #tpu.memory_space<vmem>>, %arg8: memref<1x64xf32, #tpu.memory_space<vmem>>, %arg9: memref<1x64xf32, #tpu.memory_space<vmem>>, %arg10: memref<1x1xf32, #tpu.memory_space<vmem>>, %arg11: memref<64x32xbf16, #tpu.memory_space<vmem>>, %arg12: memref<8x32xf32, #tpu.memory_space<vmem>>, %arg13: memref<1xf32, #tpu.memory_space<smem>>, %arg14: memref<1xf32, #tpu.memory_space<smem>>, %arg15: memref<16x32xf32, #tpu.memory_space<vmem>>) attributes {dimension_semantics = [], scalar_prefetch = 0 : i64, scratch_operands = 1 : i64, tpu.core_type = #tpu.core_type<tc>} {
    %c0 = arith.constant 0 : index
    %c0_0 = arith.constant 0 : index
    %0 = vector.load %arg0[%c0, %c0_0] : memref<8x32xf32, #tpu.memory_space<vmem>>, vector<8x32xf32>
    %c0_1 = arith.constant 0 : index
    %c0_2 = arith.constant 0 : index
    %1 = vector.load %arg1[%c0_1, %c0_2] : memref<8x32xf32, #tpu.memory_space<vmem>>, vector<8x32xf32>
    %c0_3 = arith.constant 0 : index
    %c0_4 = arith.constant 0 : index
    %2 = vector.load %arg2[%c0_3, %c0_4] : memref<8x1xf32, #tpu.memory_space<vmem>>, vector<8x1xf32>
    %3 = arith.truncf %0 : vector<8x32xf32> to vector<8x32xbf16>
    %c0_5 = arith.constant 0 : index
    %c0_6 = arith.constant 0 : index
    %4 = vector.load %arg3[%c0_5, %c0_6] : memref<32x64xbf16, #tpu.memory_space<vmem>>, vector<32x64xbf16>
    %cst = arith.constant dense<0.000000e+00> : vector<8x64xf32>
    %5 = tpu.matmul %3, %4, %cst {dimension_numbers = #tpu.dot_dimension_numbers<[1], [0], [0], [1], [0, 0, 1, 1], [], []>} : vector<8x32xbf16>, vector<32x64xbf16>, vector<8x64xf32> -> vector<8x64xf32>
    %c0_7 = arith.constant 0 : index
    %c0_8 = arith.constant 0 : index
    %6 = vector.load %arg4[%c0_7, %c0_8] : memref<1x64xf32, #tpu.memory_space<vmem>>, vector<1x64xf32>
    %7 = vector.broadcast %6 : vector<1x64xf32> to vector<8x64xf32>
    %8 = arith.addf %5, %7 : vector<8x64xf32>
    %cst_9 = arith.constant 0.000000e+00 : f32
    %9 = vector.broadcast %cst_9 : f32 to vector<8x64xf32>
    %10 = arith.maximumf %8, %9 : vector<8x64xf32>
    %11 = arith.truncf %10 : vector<8x64xf32> to vector<8x64xbf16>
    %c0_10 = arith.constant 0 : index
    %c0_11 = arith.constant 0 : index
    %12 = vector.load %arg5[%c0_10, %c0_11] : memref<64x32xbf16, #tpu.memory_space<vmem>>, vector<64x32xbf16>
    %cst_12 = arith.constant dense<0.000000e+00> : vector<8x32xf32>
    %13 = tpu.matmul %11, %12, %cst_12 {dimension_numbers = #tpu.dot_dimension_numbers<[1], [0], [0], [1], [0, 0, 1, 1], [], []>} : vector<8x64xbf16>, vector<64x32xbf16>, vector<8x32xf32> -> vector<8x32xf32>
    %c0_13 = arith.constant 0 : index
    %c0_14 = arith.constant 0 : index
    %14 = vector.load %arg6[%c0_13, %c0_14] : memref<1x32xf32, #tpu.memory_space<vmem>>, vector<1x32xf32>
    %15 = vector.broadcast %14 : vector<1x32xf32> to vector<8x32xf32>
    %16 = arith.addf %13, %15 : vector<8x32xf32>
    %17 = math.tanh %16 : vector<8x32xf32>
    %c0_15 = arith.constant 0 : index
    %c0_16 = arith.constant 0 : index
    %18 = vector.load %arg12[%c0_15, %c0_16] : memref<8x32xf32, #tpu.memory_space<vmem>>, vector<8x32xf32>
    tpu.vector_store %arg12[%c0_15, %c0_16], %17 {strides = array<i32>} : memref<8x32xf32, #tpu.memory_space<vmem>>, vector<8x32xf32>,
    %c0_17 = arith.constant 0 : index
    %c0_18 = arith.constant 0 : index
    %19 = vector.load %arg15[%c0_17, %c0_18] : memref<16x32xf32, #tpu.memory_space<vmem>>, vector<8x32xf32>
    tpu.vector_store %arg15[%c0_17, %c0_18], %17 {strides = array<i32>} : memref<16x32xf32, #tpu.memory_space<vmem>>, vector<8x32xf32>,
    %c8 = arith.constant 8 : index
    %c0_19 = arith.constant 0 : index
    %20 = vector.load %arg15[%c8, %c0_19] : memref<16x32xf32, #tpu.memory_space<vmem>>, vector<8x32xf32>
    tpu.vector_store %arg15[%c8, %c0_19], %1 {strides = array<i32>} : memref<16x32xf32, #tpu.memory_space<vmem>>, vector<8x32xf32>,
    %c0_20 = arith.constant 0 : index
    %c0_21 = arith.constant 0 : index
    %21 = vector.load %arg15[%c0_20, %c0_21] : memref<16x32xf32, #tpu.memory_space<vmem>>, vector<16x32xf32>
    %22 = arith.truncf %21 : vector<16x32xf32> to vector<16x32xbf16>
    %c0_22 = arith.constant 0 : index
    %c0_23 = arith.constant 0 : index
    %23 = vector.load %arg7[%c0_22, %c0_23] : memref<32x64xbf16, #tpu.memory_space<vmem>>, vector<32x64xbf16>
    %cst_24 = arith.constant dense<0.000000e+00> : vector<16x64xf32>
    %24 = tpu.matmul %22, %23, %cst_24 {dimension_numbers = #tpu.dot_dimension_numbers<[1], [0], [0], [1], [0, 0, 1, 1], [], []>} : vector<16x32xbf16>, vector<32x64xbf16>, vector<16x64xf32> -> vector<16x64xf32>
    %c0_25 = arith.constant 0 : index
    %c0_26 = arith.constant 0 : index
    %25 = vector.load %arg8[%c0_25, %c0_26] : memref<1x64xf32, #tpu.memory_space<vmem>>, vector<1x64xf32>
    %26 = vector.broadcast %25 : vector<1x64xf32> to vector<16x64xf32>
    %27 = arith.addf %24, %26 : vector<16x64xf32>
    %cst_27 = arith.constant 0.000000e+00 : f32
    %28 = vector.broadcast %cst_27 : f32 to vector<16x64xf32>
    %29 = arith.cmpf ogt, %27, %28 : vector<16x64xf32>
    %cst_28 = arith.constant 2.000000e-01 : f32
    %30 = vector.broadcast %cst_28 : f32 to vector<16x64xf32>
    %31 = arith.mulf %30, %27 : vector<16x64xf32>
    %32 = arith.select %29, %27, %31 : vector<16x64xi1>, vector<16x64xf32>
    %c0_29 = arith.constant 0 : index
    %c0_30 = arith.constant 0 : index
    %33 = vector.load %arg9[%c0_29, %c0_30] : memref<1x64xf32, #tpu.memory_space<vmem>>, vector<1x64xf32>
    %34 = vector.broadcast %33 : vector<1x64xf32> to vector<16x64xf32>
    %35 = arith.mulf %32, %34 : vector<16x64xf32>
    %cst_31 = arith.constant dense<0.000000e+00> : vector<16xf32>
    %36 = vector.multi_reduction <add>, %35, %cst_31 [1] : vector<16x64xf32> to vector<16xf32>
    %37 = vector.shape_cast %36 : vector<16xf32> to vector<16x1xf32>
    %c0_32 = arith.constant 0 : index
    %c0_33 = arith.constant 0 : index
    %38 = vector.load %arg10[%c0_32, %c0_33] : memref<1x1xf32, #tpu.memory_space<vmem>>, vector<1x1xf32>
    %39 = vector.broadcast %38 : vector<1x1xf32> to vector<16x1xf32>
    %40 = arith.addf %37, %39 : vector<16x1xf32>
    %41 = vector.extract_strided_slice %40 {offsets = [0, 0], sizes = [8, 1], strides = [1, 1]} : vector<16x1xf32> to vector<8x1xf32>
    %42 = vector.extract_strided_slice %40 {offsets = [8, 0], sizes = [8, 1], strides = [1, 1]} : vector<16x1xf32> to vector<8x1xf32>
    %43 = vector.extract_strided_slice %27 {offsets = [0, 0], sizes = [8, 64], strides = [1, 1]} : vector<16x64xf32> to vector<8x64xf32>
    %44 = vector.extract_strided_slice %27 {offsets = [8, 0], sizes = [8, 64], strides = [1, 1]} : vector<16x64xf32> to vector<8x64xf32>
    %45 = vector.broadcast %2 : vector<8x1xf32> to vector<8x64xf32>
    %46 = arith.mulf %45, %44 : vector<8x64xf32>
    %cst_34 = arith.constant 1.000000e+00 : f32
    %47 = vector.broadcast %cst_34 : f32 to vector<8x1xf32>
    %48 = arith.subf %47, %2 : vector<8x1xf32>
    %49 = vector.broadcast %48 : vector<8x1xf32> to vector<8x64xf32>
    %50 = arith.mulf %49, %43 : vector<8x64xf32>
    %51 = arith.addf %46, %50 : vector<8x64xf32>
    %cst_35 = arith.constant 0.000000e+00 : f32
    %52 = vector.broadcast %cst_35 : f32 to vector<8x64xf32>
    %53 = arith.cmpf ogt, %51, %52 : vector<8x64xf32>
    %cst_36 = arith.constant 1.000000e+00 : f32
    %cst_37 = arith.constant 2.000000e-01 : f32
    %54 = vector.broadcast %cst_36 : f32 to vector<8x64xf32>
    %55 = vector.broadcast %cst_37 : f32 to vector<8x64xf32>
    %56 = arith.select %53, %54, %55 : vector<8x64xi1>, vector<8x64xf32>
    %57 = vector.broadcast %33 : vector<1x64xf32> to vector<8x64xf32>
    %58 = arith.mulf %56, %57 : vector<8x64xf32>
    %59 = arith.truncf %58 : vector<8x64xf32> to vector<8x64xbf16>
    %c0_38 = arith.constant 0 : index
    %c0_39 = arith.constant 0 : index
    %60 = vector.load %arg11[%c0_38, %c0_39] : memref<64x32xbf16, #tpu.memory_space<vmem>>, vector<64x32xbf16>
    %cst_40 = arith.constant dense<0.000000e+00> : vector<8x32xf32>
    %61 = tpu.matmul %59, %60, %cst_40 {dimension_numbers = #tpu.dot_dimension_numbers<[1], [0], [0], [1], [0, 0, 1, 1], [], []>} : vector<8x64xbf16>, vector<64x32xbf16>, vector<8x32xf32> -> vector<8x32xf32>
    %62 = arith.mulf %61, %61 : vector<8x32xf32>
    %cst_41 = arith.constant dense<0.000000e+00> : vector<8xf32>
    %63 = vector.multi_reduction <add>, %62, %cst_41 [1] : vector<8x32xf32> to vector<8xf32>
    %64 = vector.shape_cast %63 : vector<8xf32> to vector<8x1xf32>
    %65 = math.sqrt %64 : vector<8x1xf32>
    %cst_42 = arith.constant 1.000000e+00 : f32
    %66 = vector.broadcast %cst_42 : f32 to vector<8x1xf32>
    %67 = arith.subf %65, %66 : vector<8x1xf32>
    %68 = arith.mulf %67, %67 : vector<8x1xf32>
    %69 = vector.shape_cast %68 : vector<8x1xf32> to vector<1x8x1xf32>
    %cst_43 = arith.constant dense<0.000000e+00> : vector<1xf32>
    %70 = vector.multi_reduction <add>, %69, %cst_43 [1, 2] : vector<1x8x1xf32> to vector<1xf32>
    %71 = vector.shape_cast %70 : vector<1xf32> to vector<1x1x1xf32>
    %72 = vector.extract %71[0, 0, 0] : f32 from vector<1x1x1xf32>
    %cst_44 = arith.constant 8.000000e+00 : f32
    %73 = arith.divf %72, %cst_44 : f32
    %74 = vector.shape_cast %41 : vector<8x1xf32> to vector<1x8x1xf32>
    %cst_45 = arith.constant dense<0.000000e+00> : vector<1xf32>
    %75 = vector.multi_reduction <add>, %74, %cst_45 [1, 2] : vector<1x8x1xf32> to vector<1xf32>
    %76 = vector.shape_cast %75 : vector<1xf32> to vector<1x1x1xf32>
    %77 = vector.extract %76[0, 0, 0] : f32 from vector<1x1x1xf32>
    %cst_46 = arith.constant 8.000000e+00 : f32
    %78 = arith.divf %77, %cst_46 : f32
    %79 = vector.shape_cast %42 : vector<8x1xf32> to vector<1x8x1xf32>
    %cst_47 = arith.constant dense<0.000000e+00> : vector<1xf32>
    %80 = vector.multi_reduction <add>, %79, %cst_47 [1, 2] : vector<1x8x1xf32> to vector<1xf32>
    %81 = vector.shape_cast %80 : vector<1xf32> to vector<1x1x1xf32>
    %82 = vector.extract %81[0, 0, 0] : f32 from vector<1x1x1xf32>
    %cst_48 = arith.constant 8.000000e+00 : f32
    %83 = arith.divf %82, %cst_48 : f32
    %cst_49 = arith.constant 0.000000e+00 : f32
    %84 = arith.subf %cst_49, %78 : f32
    %c0_50 = arith.constant 0 : index
    %85 = memref.load %arg13[%c0_50] : memref<1xf32, #tpu.memory_space<smem>>
    memref.store %84, %arg13[%c0_50] : memref<1xf32, #tpu.memory_space<smem>>
    %cst_51 = arith.constant 0.000000e+00 : f32
    %86 = arith.subf %cst_51, %83 : f32
    %87 = arith.addf %86, %78 : f32
    %88 = arith.addf %87, %73 : f32
    %c0_52 = arith.constant 0 : index
    %89 = memref.load %arg14[%c0_52] : memref<1xf32, #tpu.memory_space<smem>>
    memref.store %88, %arg14[%c0_52] : memref<1xf32, #tpu.memory_space<smem>>
    return
  }
}

</mosaic_0001>

<llo_original>
// kernel: tpu_custom_call.1
$region0: #{tpu_custom_call.1}
  #allocation0 [shape = 'u32[]', space=smem, size = 0x4, offset = 0x4, fixed_abs, tag = 'smem constant byte address 0x4 - core index']
  #allocation1 [shape = 'u32[144,128]{1,0:T(1,128)}', space=vmem, size = 0x12000, scoped, tag = 'internal scratch']
  #allocation2 [shape = 'f32[16,32]{1,0:T(8,128)}', space=vmem, size = 0x2000, scoped, tag = 'scratch operand']
  #allocation3 [shape = 'f32[1,1]{1,0:T(1,128)S(1)}', space=vmem, size = 0x200, scoped, tag = 'scoped memory for tpu_custom_call.1']
  %s0 = inlined_call_operand.vmem [shape: f32[8,32], index: 0, kind: input, shape index: {}]
  %s1 = inlined_call_operand.vmem [shape: f32[8,32], index: 1, kind: input, shape index: {}]
  %s2 = inlined_call_operand.vmem [shape: f32[8,1], index: 2, kind: input, shape index: {}]
  %s3 = inlined_call_operand.vmem [shape: bf16[32,64], index: 3, kind: input, shape index: {}]
  %s4 = inlined_call_operand.vmem [shape: f32[1,64], index: 4, kind: input, shape index: {}]
  %s5 = inlined_call_operand.vmem [shape: bf16[64,32], index: 5, kind: input, shape index: {}]
  %s6 = inlined_call_operand.vmem [shape: f32[1,32], index: 6, kind: input, shape index: {}]
  %s7 = inlined_call_operand.vmem [shape: bf16[32,64], index: 7, kind: input, shape index: {}]
  %s8 = inlined_call_operand.vmem [shape: f32[1,64], index: 8, kind: input, shape index: {}]
  %s9 = inlined_call_operand.vmem [shape: f32[1,64], index: 9, kind: input, shape index: {}]
  %s10 = inlined_call_operand.<no memory space> [shape: f32[1,1], index: 10, kind: input, shape index: {}]
  %s11 = inlined_call_operand.vmem [shape: bf16[64,32], index: 11, kind: input, shape index: {}]
  %s12 = inlined_call_operand.hbm [shape: f32[8,32], index: 12, kind: output, shape index: {0}]
  %s13 = inlined_call_operand.hbm [shape: f32[1], index: 13, kind: output, shape index: {1}]
  %s14 = inlined_call_operand.hbm [shape: f32[1], index: 14, kind: output, shape index: {2}]
  %15 = xla_tuple %s12, %s13, %s14
  %s16 = sld [smem:[#allocation0]]
  $region74: #{tpu_custom_call.1} parent=0
    _
  %s18 = ssub.s32 1, %s16
  %s19 = scalar_select 0, %s18, %s16
  %v20 = vstv %s10
  %21 = vst [vmem:[#allocation3] sm:$0x1] %v20
  $region1: #{tpu_custom_call.1} parent=0
    #allocation4 [shape = 'u8[4096]{0}', space=vmem, size = 0x1000, scoped, tag = 'output window, operand 0, single buffered']
    #allocation5 [shape = 's32[1]{0}', space=sflag, size = 0x4, scoped, tag = 'scoped memory for tpu_custom_call.1']
    #allocation6 [shape = 's32[1]{0}', space=sflag, size = 0x4, scoped, tag = 'scoped memory for tpu_custom_call.1']
    #allocation7 [shape = 'u8[512]{0}', space=smem, size = 0x200, scoped, tag = 'output window, operand 1, single buffered']
    #allocation8 [shape = 'u8[512]{0}', space=smem, size = 0x200, scoped, tag = 'output window, operand 2, single buffered']
    #allocation9 [shape = 's32[1]{0}', space=sflag, size = 0x4, scoped, tag = 'scoped memory for tpu_custom_call.1']
    %22 = vsyncpa [#allocation5], 0
    %23 = vsyncpa [#allocation6], 0
    %24 = vsyncpa [#allocation9], 0
    // Predicated region
    $region2: #{tpu_custom_call.1} parent=1 // pred_check
      _
    $region3: #{tpu_custom_call.1} parent=1 // pred_check_branch
      %26 = sbr.rel (0) target = $region5
    $region4: #{tpu_custom_call.1} parent=1 // pred_region
      _
    $region5: #{tpu_custom_call.1} parent=1 // pred_fallthru
      _
    // Predicated region
    $region6: #{tpu_custom_call.1} parent=1 // pred_check
      _
    $region7: #{tpu_custom_call.1} parent=1 // pred_check_branch
      %28 = sbr.rel (0) target = $region9
    $region8: #{tpu_custom_call.1} parent=1 // pred_region
      _
    $region9: #{tpu_custom_call.1} parent=1 // pred_fallthru
      _
    // Predicated region
    $region10: #{tpu_custom_call.1} parent=1 // pred_check
      _
    $region11: #{tpu_custom_call.1} parent=1 // pred_check_branch
      %30 = sbr.rel (0) target = $region13
    $region12: #{tpu_custom_call.1} parent=1 // pred_region
      _
    $region13: #{tpu_custom_call.1} parent=1 // pred_fallthru
      _
    // Predicated region
    $region14: #{tpu_custom_call.1} parent=1 // pred_check
      _
    $region15: #{tpu_custom_call.1} parent=1 // pred_check_branch
      %32 = sbr.rel (0) target = $region17
    $region16: #{tpu_custom_call.1} parent=1 // pred_region
      _
    $region17: #{tpu_custom_call.1} parent=1 // pred_fallthru
      _
    // Predicated region
    $region18: #{tpu_custom_call.1} parent=1 // pred_check
      _
    $region19: #{tpu_custom_call.1} parent=1 // pred_check_branch
      %34 = sbr.rel (0) target = $region21
    $region20: #{tpu_custom_call.1} parent=1 // pred_region
      _
    $region21: #{tpu_custom_call.1} parent=1 // pred_fallthru
      _
    // Predicated region
    $region22: #{tpu_custom_call.1} parent=1 // pred_check
      _
    $region23: #{tpu_custom_call.1} parent=1 // pred_check_branch
      %36 = sbr.rel (0) target = $region25
    $region24: #{tpu_custom_call.1} parent=1 // pred_region
      _
    $region25: #{tpu_custom_call.1} parent=1 // pred_fallthru
      _
    // Predicated region
    $region26: #{tpu_custom_call.1} parent=1 // pred_check
      _
    $region27: #{tpu_custom_call.1} parent=1 // pred_check_branch
      %38 = sbr.rel (0) target = $region29
    $region28: #{tpu_custom_call.1} parent=1 // pred_region
      _
    $region29: #{tpu_custom_call.1} parent=1 // pred_fallthru
      _
    // Predicated region
    $region30: #{tpu_custom_call.1} parent=1 // pred_check
      _
    $region31: #{tpu_custom_call.1} parent=1 // pred_check_branch
      %40 = sbr.rel (0) target = $region33
    $region32: #{tpu_custom_call.1} parent=1 // pred_region
      _
    $region33: #{tpu_custom_call.1} parent=1 // pred_fallthru
      _
    // Predicated region
    $region34: #{tpu_custom_call.1} parent=1 // pred_check
      _
    $region35: #{tpu_custom_call.1} parent=1 // pred_check_branch
      %42 = sbr.rel (0) target = $region37
    $region36: #{tpu_custom_call.1} parent=1 // pred_region
      _
    $region37: #{tpu_custom_call.1} parent=1 // pred_fallthru
      _
    // Predicated region
    $region38: #{tpu_custom_call.1} parent=1 // pred_check
      _
    $region39: #{tpu_custom_call.1} parent=1 // pred_check_branch
      %44 = sbr.rel (0) target = $region41
    $region40: #{tpu_custom_call.1} parent=1 // pred_region
      _
    $region41: #{tpu_custom_call.1} parent=1 // pred_fallthru
      _
    // Predicated region
    $region42: #{tpu_custom_call.1} parent=1 // pred_check
      _
    $region43: #{tpu_custom_call.1} parent=1 // pred_check_branch
      %46 = sbr.rel (0) target = $region45
    $region44: #{tpu_custom_call.1} parent=1 // pred_region
      _
    $region45: #{tpu_custom_call.1} parent=1 // pred_fallthru
      _
    // Predicated region
    $region46: #{tpu_custom_call.1} parent=1 // pred_check
      _
    $region47: #{tpu_custom_call.1} parent=1 // pred_check_branch
      %48 = sbr.rel (0) target = $region49
    $region48: #{tpu_custom_call.1} parent=1 // pred_region
      _
    $region49: #{tpu_custom_call.1} parent=1 // pred_fallthru
      _
    %v50 = vld [vmem:[%s0] sm:$0xff]
    %v51 = vld [vmem:[%s1] sm:$0xff]
    %v52 = vld [vmem:[%s2] sm:$0xff]
    %v53 = vpack.c.bf16 %v50, %v50
    %v54 = vld [vmem:[%s3] sm:$0xf]
    %v55 = vld [vmem:[%s3 + $0x4] sm:$0xf]
    %v56 = vld [vmem:[%s3 + $0x8] sm:$0xf]
    %v57 = vld [vmem:[%s3 + $0xc] sm:$0xf]
    %v58 = vld [vmem:[%s4] sm:$0x1]
    %v60 = vlaneseq
    %v61 = vshrl.u32 %v60, 7
    %v62 = vsub.s32 0, %v61
    %v63 = vrot.slane %v58, %v62
    %v69 = vunpack.c.l.b16 %v54
    %v70 = vunpack.c.l.b16 %v55
    %v71 = vunpack.c.l.b16 %v56
    %v72 = vunpack.c.l.b16 %v57
    %v73 = vpack.c.b16 %v70, %v69
    %v74 = vpack.c.b16 %v72, %v71
    %vm77 = vcmask 261120
    %v79 = vsel %vm77, %v53, 0
    %81 = vmatprep.subr.bf16.mxu0 0
    %82 = vmatpush1.bf16.msra.mxu0 0
    %83 = vmatprep.subr.bf16.mxu0 0
    %84 = vmatpush1.bf16.msra.mxu0 0
    %85 = vmatprep.subr.bf16.mxu0 0
    %86 = vmatpush1.bf16.msra.mxu0 0
    %87 = vmatprep.subr.bf16.mxu0 0
    %88 = vmatpush1.bf16.msra.mxu0 0
    %89 = vmatprep.subr.bf16.mxu0 0
    %90 = vmatpush1.bf16.msra.mxu0 0
    %91 = vmatprep.subr.bf16.mxu0 0
    %92 = vmatpush1.bf16.msra.mxu0 0
    %93 = vmatprep.subr.bf16.mxu0 0
    %94 = vmatpush1.bf16.msra.mxu0 %v74
    %95 = vmatprep.subr.bf16.mxu0 0
    %96 = vmatpush1.bf16.msra.mxu0 %v73
    %97 = vmatprep.subr.bf16.mxu0 0
    %98 = vmatpush2.bf16.msra.mxu0 0
    %99 = vmatprep.subr.bf16.mxu0 0
    %100 = vmatpush2.bf16.msra.mxu0 0
    %101 = vmatprep.subr.bf16.mxu0 0
    %102 = vmatpush2.bf16.msra.mxu0 0
    %103 = vmatprep.subr.bf16.mxu0 0
    %104 = vmatpush2.bf16.msra.mxu0 0
    %105 = vmatprep.subr.bf16.mxu0 0
    %106 = vmatpush2.bf16.msra.mxu0 0
    %107 = vmatprep.subr.bf16.mxu0 0
    %108 = vmatpush2.bf16.msra.mxu0 0
    %109 = vmatprep.subr.bf16.mxu0 0
    %110 = vmatpush2.bf16.msra.mxu0 0
    %111 = vmatprep.subr.bf16.mxu0 0
    %112 = vmatpush2.bf16.msra.mxu0 0
    %113 = vmatprep.mubr.bf16.mxu0 0
    %114 = vmatmul.mubr.bf16.gmra.mxu0 %v79
    %v115 = vpop.f32.mrf.mxu0
    %v116 = vadd.f32 %v63, %v115
    %v117 = vpop.f32.mrf.mxu0
    %v118 = vpop.f32.mrf.mxu0
    %v119 = vpop.f32.mrf.mxu0
    %120 = vdwg.mxu0
    %v121 = vmax.f32 %v116, 0.0
    %v122 = vpack.c.bf16 %v121, %v121
    %v123 = vld [vmem:[%s5] sm:$0xf]
    %v124 = vld [vmem:[%s5 + $0x4] sm:$0xf]
    %v125 = vld [vmem:[%s5 + $0x8] sm:$0xf]
    %v126 = vld [vmem:[%s5 + $0xc] sm:$0xf]
    %v127 = vld [vmem:[%s5 + $0x10] sm:$0xf]
    %v128 = vld [vmem:[%s5 + $0x14] sm:$0xf]
    %v129 = vld [vmem:[%s5 + $0x18] sm:$0xf]
    %v130 = vld [vmem:[%s5 + $0x1c] sm:$0xf]
    %v131 = vld [vmem:[%s6] sm:$0x1]
    %v133 = vlaneseq
    %v134 = vshrl.u32 %v133, 7
    %v135 = vsub.s32 0, %v134
    %v136 = vrot.slane %v131, %v135
    %v146 = vunpack.c.l.b16 %v123
    %v147 = vunpack.c.l.b16 %v124
    %v148 = vunpack.c.l.b16 %v125
    %v149 = vunpack.c.l.b16 %v126
    %v150 = vunpack.c.l.b16 %v127
    %v151 = vunpack.c.l.b16 %v128
    %v152 = vunpack.c.l.b16 %v129
    %v153 = vunpack.c.l.b16 %v130
    %v154 = vpack.c.b16 %v147, %v146
    %v155 = vpack.c.b16 %v149, %v148
    %v156 = vpack.c.b16 %v151, %v150
    %v157 = vpack.c.b16 %v153, %v152
    %vm162 = vcmask 523264
    %v164 = vsel %vm162, %v122, 0
    %166 = vmatprep.subr.bf16.mxu0 0
    %167 = vmatpush1.bf16.msra.mxu0 0
    %168 = vmatprep.subr.bf16.mxu0 0
    %169 = vmatpush1.bf16.msra.mxu0 0
    %170 = vmatprep.subr.bf16.mxu0 0
    %171 = vmatpush1.bf16.msra.mxu0 0
    %172 = vmatprep.subr.bf16.mxu0 0
    %173 = vmatpush1.bf16.msra.mxu0 0
    %174 = vmatprep.subr.bf16.mxu0 0
    %175 = vmatpush1.bf16.msra.mxu0 %v157
    %176 = vmatprep.subr.bf16.mxu0 0
    %177 = vmatpush1.bf16.msra.mxu0 %v156
    %178 = vmatprep.subr.bf16.mxu0 0
    %179 = vmatpush1.bf16.msra.mxu0 %v155
    %180 = vmatprep.subr.bf16.mxu0 0
    %181 = vmatpush1.bf16.msra.mxu0 %v154
    %182 = vmatprep.subr.bf16.mxu0 0
    %183 = vmatpush2.bf16.msra.mxu0 0
    %184 = vmatprep.subr.bf16.mxu0 0
    %185 = vmatpush2.bf16.msra.mxu0 0
    %186 = vmatprep.subr.bf16.mxu0 0
    %187 = vmatpush2.bf16.msra.mxu0 0
    %188 = vmatprep.subr.bf16.mxu0 0
    %189 = vmatpush2.bf16.msra.mxu0 0
    %190 = vmatprep.subr.bf16.mxu0 0
    %191 = vmatpush2.bf16.msra.mxu0 0
    %192 = vmatprep.subr.bf16.mxu0 0
    %193 = vmatpush2.bf16.msra.mxu0 0
    %194 = vmatprep.subr.bf16.mxu0 0
    %195 = vmatpush2.bf16.msra.mxu0 0
    %196 = vmatprep.subr.bf16.mxu0 0
    %197 = vmatpush2.bf16.msra.mxu0 0
    %198 = vmatprep.mubr.bf16.mxu0 0
    %199 = vmatmul.mubr.bf16.gmra.mxu0 %v164
    %v200 = vpop.f32.mrf.mxu0
    %v201 = vadd.f32 %v136, %v200
    %v202 = vpop.f32.mrf.mxu0
    %v203 = vpop.f32.mrf.mxu0
    %v204 = vpop.f32.mrf.mxu0
    %205 = vdwg.mxu0
    %v206 = vtanh.pop %v201
    %207 = vst.msk [vmem:[#allocation4] sm:$0xff] %vm77, %v206
    %208 = vst.msk [vmem:[#allocation2] sm:$0xff] %vm77, %v206
    %209 = vst.msk [vmem:[#allocation2 + $0x8] sm:$0xff] %vm77, %v51
    %v210 = vld [vmem:[#allocation2] sm:$0xff]
    %v211 = vld [vmem:[#allocation2 + $0x8] sm:$0xff]
    %v212 = vpack.c.bf16 %v211, %v210
    %v213 = vld [vmem:[%s7] sm:$0xf]
    %v214 = vld [vmem:[%s7 + $0x4] sm:$0xf]
    %v215 = vld [vmem:[%s7 + $0x8] sm:$0xf]
    %v216 = vld [vmem:[%s7 + $0xc] sm:$0xf]
    %v217 = vld [vmem:[%s8] sm:$0x1]
    %v219 = vlaneseq
    %v220 = vshrl.u32 %v219, 7
    %v221 = vsub.s32 0, %v220
    %v222 = vrot.slane %v217, %v221
    %v228 = vunpack.c.l.b16 %v213
    %v229 = vunpack.c.l.b16 %v214
    %v230 = vunpack.c.l.b16 %v215
    %v231 = vunpack.c.l.b16 %v216
    %v232 = vpack.c.b16 %v229, %v228
    %v233 = vpack.c.b16 %v231, %v230
    %v237 = vsel %vm77, %v212, 0
    %239 = vmatprep.subr.bf16.mxu0 0
    %240 = vmatpush1.bf16.msra.mxu0 0
    %241 = vmatprep.subr.bf16.mxu0 0
    %242 = vmatpush1.bf16.msra.mxu0 0
    %243 = vmatprep.subr.bf16.mxu0 0
    %244 = vmatpush1.bf16.msra.mxu0 0
    %245 = vmatprep.subr.bf16.mxu0 0
    %246 = vmatpush1.bf16.msra.mxu0 0
    %247 = vmatprep.subr.bf16.mxu0 0
    %248 = vmatpush1.bf16.msra.mxu0 0
    %249 = vmatprep.subr.bf16.mxu0 0
    %250 = vmatpush1.bf16.msra.mxu0 0
    %251 = vmatprep.subr.bf16.mxu0 0
    %252 = vmatpush1.bf16.msra.mxu0 %v233
    %253 = vmatprep.subr.bf16.mxu0 0
    %254 = vmatpush1.bf16.msra.mxu0 %v232
    %255 = vmatprep.subr.bf16.mxu0 0
    %256 = vmatpush2.bf16.msra.mxu0 0
    %257 = vmatprep.subr.bf16.mxu0 0
    %258 = vmatpush2.bf16.msra.mxu0 0
    %259 = vmatprep.subr.bf16.mxu0 0
    %260 = vmatpush2.bf16.msra.mxu0 0
    %261 = vmatprep.subr.bf16.mxu0 0
    %262 = vmatpush2.bf16.msra.mxu0 0
    %263 = vmatprep.subr.bf16.mxu0 0
    %264 = vmatpush2.bf16.msra.mxu0 0
    %265 = vmatprep.subr.bf16.mxu0 0
    %266 = vmatpush2.bf16.msra.mxu0 0
    %267 = vmatprep.subr.bf16.mxu0 0
    %268 = vmatpush2.bf16.msra.mxu0 0
    %269 = vmatprep.subr.bf16.mxu0 0
    %270 = vmatpush2.bf16.msra.mxu0 0
    %271 = vmatprep.mubr.bf16.mxu0 0
    %272 = vmatmul.mubr.bf16.gmra.mxu0 %v237
    %v273 = vpop.f32.mrf.mxu0
    %v274 = vadd.f32 %v222, %v273
    %v275 = vpop.f32.mrf.mxu0
    %v276 = vpop.f32.mrf.mxu0
    %v277 = vadd.f32 %v222, %v276
    %v278 = vpop.f32.mrf.mxu0
    %279 = vdwg.mxu0
    %vm280 = vcmp.gt.f32.partialorder %v274, 0.0
    %vm281 = vcmp.gt.f32.partialorder %v277, 0.0
    %v282 = vmul.f32 %v274, 0.2
    %v283 = vmul.f32 %v277, 0.2
    %v284 = vsel %vm280, %v274, %v282
    %v285 = vsel %vm281, %v277, %v283
    %v286 = vld [vmem:[%s9] sm:$0x1]
    %v288 = vlaneseq
    %v289 = vshrl.u32 %v288, 7
    %v290 = vsub.s32 0, %v289
    %v291 = vrot.slane %v286, %v290
    %v293 = vmul.f32 %v284, %v291
    %v294 = vmul.f32 %v285, %v291
    %v295 = vsel %vm162, %v293, 0.0
    %296 = vadd.xlane.f32.xlu0 %v295
    %v297 = vpop.xlane.xlu0 %296
    %v298 = vsel %vm162, %v294, 0.0
    %299 = vadd.xlane.f32.xlu0 %v298
    %v300 = vpop.xlane.xlu0 %299
    %v301 = vld [vmem:[#allocation3] sm:$0x1]
    %v303 = vlaneseq
    %v304 = vshrl.u32 %v303, 7
    %v305 = vsub.s32 0, %v304
    %v306 = vrot.slane %v301, %v305
    %v308 = vadd.f32 %v297, %v306
    %v309 = vadd.f32 %v300, %v306
    %311 = vset.pattern.permute.xlu0 0
    %312 = vperm.xlu0 %311, %v52
    %v313 = vpop.permute.xlu0 %312
    %v315 = vmul.f32 %v313, %v277
    %v316 = vsub.f32 1.0, %v52
    %318 = vset.pattern.permute.xlu0 0
    %319 = vperm.xlu0 %318, %v316
    %v320 = vpop.permute.xlu0 %319
    %v322 = vmul.f32 %v320, %v274
    %v323 = vadd.f32 %v315, %v322
    %vm324 = vcmp.gt.f32.partialorder %v323, 0.0
    %v325 = vsel %vm324, 1.0, 0.2
    %v326 = vmul.f32 %v325, %v291
    %v327 = vpack.c.bf16 %v326, %v326
    %v328 = vld [vmem:[%s11] sm:$0xf]
    %v329 = vld [vmem:[%s11 + $0x4] sm:$0xf]
    %v330 = vld [vmem:[%s11 + $0x8] sm:$0xf]
    %v331 = vld [vmem:[%s11 + $0xc] sm:$0xf]
    %v332 = vld [vmem:[%s11 + $0x10] sm:$0xf]
    %v333 = vld [vmem:[%s11 + $0x14] sm:$0xf]
    %v334 = vld [vmem:[%s11 + $0x18] sm:$0xf]
    %v335 = vld [vmem:[%s11 + $0x1c] sm:$0xf]
    %v344 = vunpack.c.l.b16 %v328
    %v345 = vunpack.c.l.b16 %v329
    %v346 = vunpack.c.l.b16 %v330
    %v347 = vunpack.c.l.b16 %v331
    %v348 = vunpack.c.l.b16 %v332
    %v349 = vunpack.c.l.b16 %v333
    %v350 = vunpack.c.l.b16 %v334
    %v351 = vunpack.c.l.b16 %v335
    %v352 = vpack.c.b16 %v345, %v344
    %v353 = vpack.c.b16 %v347, %v346
    %v354 = vpack.c.b16 %v349, %v348
    %v355 = vpack.c.b16 %v351, %v350
    %v361 = vsel %vm162, %v327, 0
    %363 = vmatprep.subr.bf16.mxu0 0
    %364 = vmatpush1.bf16.msra.mxu0 0
    %365 = vmatprep.subr.bf16.mxu0 0
    %366 = vmatpush1.bf16.msra.mxu0 0
    %367 = vmatprep.subr.bf16.mxu0 0
    %368 = vmatpush1.bf16.msra.mxu0 0
    %369 = vmatprep.subr.bf16.mxu0 0
    %370 = vmatpush1.bf16.msra.mxu0 0
    %371 = vmatprep.subr.bf16.mxu0 0
    %372 = vmatpush1.bf16.msra.mxu0 %v355
    %373 = vmatprep.subr.bf16.mxu0 0
    %374 = vmatpush1.bf16.msra.mxu0 %v354
    %375 = vmatprep.subr.bf16.mxu0 0
    %376 = vmatpush1.bf16.msra.mxu0 %v353
    %377 = vmatprep.subr.bf16.mxu0 0
    %378 = vmatpush1.bf16.msra.mxu0 %v352
    %379 = vmatprep.subr.bf16.mxu0 0
    %380 = vmatpush2.bf16.msra.mxu0 0
    %381 = vmatprep.subr.bf16.mxu0 0
    %382 = vmatpush2.bf16.msra.mxu0 0
    %383 = vmatprep.subr.bf16.mxu0 0
    %384 = vmatpush2.bf16.msra.mxu0 0
    %385 = vmatprep.subr.bf16.mxu0 0
    %386 = vmatpush2.bf16.msra.mxu0 0
    %387 = vmatprep.subr.bf16.mxu0 0
    %388 = vmatpush2.bf16.msra.mxu0 0
    %389 = vmatprep.subr.bf16.mxu0 0
    %390 = vmatpush2.bf16.msra.mxu0 0
    %391 = vmatprep.subr.bf16.mxu0 0
    %392 = vmatpush2.bf16.msra.mxu0 0
    %393 = vmatprep.subr.bf16.mxu0 0
    %394 = vmatpush2.bf16.msra.mxu0 0
    %395 = vmatprep.mubr.bf16.mxu0 0
    %396 = vmatmul.mubr.bf16.gmra.mxu0 %v361
    %v397 = vpop.f32.mrf.mxu0
    %v398 = vadd.f32 0.0, %v397
    %v399 = vpop.f32.mrf.mxu0
    %v400 = vpop.f32.mrf.mxu0
    %v401 = vpop.f32.mrf.mxu0
    %402 = vdwg.mxu0
    %v403 = vmul.f32 %v398, %v398
    %v404 = vsel %vm77, %v403, 0.0
    %405 = vadd.xlane.f32.xlu0 %v404
    %v406 = vpop.xlane.xlu0 %405
    %v407 = vrsqrt.pop %v406
    %v408 = vmul.f32 %v406, %v407
    %vm409 = vcmp.eq.f32.partialorder %v406, inf
    %v410 = vsel %vm409, %v406, %v408
    %vm411 = vcmp.eq.f32.partialorder %v406, 0.0
    %v412 = vand.u32 %v406, 2147483648
    %v413 = vsel %vm411, %v412, %v410
    %v414 = vsub.f32 %v413, 1.0
    %v415 = vmul.f32 %v414, %v414
    %vm416 = vcmask 7168
    %v417 = vsel %vm416, %v415, 0.0
    %418 = vadd.xlane.f32.xlu0 %v417
    %v419 = vpop.xlane.xlu0 %418
    %v420 = vrot.slane %v419, 4
    %v421 = vadd.f32 %v419, %v420
    %v422 = vrot.slane %v421, 2
    %v423 = vadd.f32 %v421, %v422
    %v424 = vrot.slane %v423, 1
    %v425 = vadd.f32 %v423, %v424
    %s426 = vtos %v425
    %v427 = vrcp.pop 8.0
    %s428 = vtos %v427
    %s429 = smul.f32 %s426, %s428
    %v430 = vsel %vm416, %v308, 0.0
    %431 = vadd.xlane.f32.xlu0 %v430
    %v432 = vpop.xlane.xlu0 %431
    %v433 = vrot.slane %v432, 4
    %v434 = vadd.f32 %v432, %v433
    %v435 = vrot.slane %v434, 2
    %v436 = vadd.f32 %v434, %v435
    %v437 = vrot.slane %v436, 1
    %v438 = vadd.f32 %v436, %v437
    %s439 = vtos %v438
    %v440 = vrcp.pop 8.0
    %s441 = vtos %v440
    %s442 = smul.f32 %s439, %s441
    %v443 = vsel %vm416, %v309, 0.0
    %444 = vadd.xlane.f32.xlu0 %v443
    %v445 = vpop.xlane.xlu0 %444
    %v446 = vrot.slane %v445, 4
    %v447 = vadd.f32 %v445, %v446
    %v448 = vrot.slane %v447, 2
    %v449 = vadd.f32 %v447, %v448
    %v450 = vrot.slane %v449, 1
    %v451 = vadd.f32 %v449, %v450
    %s452 = vtos %v451
    %v453 = vrcp.pop 8.0
    %s454 = vtos %v453
    %s455 = smul.f32 %s452, %s454
    %s456 = ssub.f32 0.0, %s442
    %s457 = scalar_lea.smem [#allocation7], 0
    %458 = sst [smem:[%s457]] %s456
    %s459 = ssub.f32 0.0, %s455
    %s460 = sadd.f32 %s459, %s442
    %s461 = sadd.f32 %s460, %s429
    %s462 = scalar_lea.smem [#allocation8], 0
    %463 = sst [smem:[%s462]] %s461
    // Predicated region
    $region50: #{tpu_custom_call.1} parent=1 // pred_check
      _
    $region51: #{tpu_custom_call.1} parent=1 // pred_check_branch
      %465 = sbr.rel (0) target = $region53
    $region52: #{tpu_custom_call.1} parent=1 // pred_region
      %s467 = ssub.s32 128, 128
      %468 = vsyncadd [#allocation5], %s467
      %s470 = sshll.u32 [#allocation4], 4
      %s471 = int_to_ptr.vmem [resolvable:$true] %s470
      %473 = dma.vmem_to_hbm [thread:$0]  %s471, 128, %s12, [#allocation5]
    $region53: #{tpu_custom_call.1} parent=1 // pred_fallthru
      _
    // Predicated region
    $region54: #{tpu_custom_call.1} parent=1 // pred_check
      _
    $region55: #{tpu_custom_call.1} parent=1 // pred_check_branch
      %475 = sbr.rel (0) target = $region57
    $region56: #{tpu_custom_call.1} parent=1 // pred_region
      %s477 = ssub.s32 16, 16
      %478 = vsyncadd [#allocation6], %s477
      %481 = dma.smem_to_hbm [#allocation7], 16, %s13, [#allocation6]
    $region57: #{tpu_custom_call.1} parent=1 // pred_fallthru
      _
    // Predicated region
    $region58: #{tpu_custom_call.1} parent=1 // pred_check
      _
    $region59: #{tpu_custom_call.1} parent=1 // pred_check_branch
      %483 = sbr.rel (0) target = $region61
    $region60: #{tpu_custom_call.1} parent=1 // pred_region
      %s485 = ssub.s32 16, 16
      %486 = vsyncadd [#allocation9], %s485
      %489 = dma.smem_to_hbm [#allocation8], 16, %s14, [#allocation9]
    $region61: #{tpu_custom_call.1} parent=1 // pred_fallthru
      _
    // Predicated region
    $region62: #{tpu_custom_call.1} parent=1 // pred_check
      _
    $region63: #{tpu_custom_call.1} parent=1 // pred_check_branch
      %491 = sbr.rel (0) target = $region65
    $region64: #{tpu_custom_call.1} parent=1 // pred_region
      %492 = dma.done [#allocation5], 128
    $region65: #{tpu_custom_call.1} parent=1 // pred_fallthru
      _
    // Predicated region
    $region66: #{tpu_custom_call.1} parent=1 // pred_check
      _
    $region67: #{tpu_custom_call.1} parent=1 // pred_check_branch
      %494 = sbr.rel (0) target = $region69
    $region68: #{tpu_custom_call.1} parent=1 // pred_region
      %495 = dma.done [#allocation6], 16
    $region69: #{tpu_custom_call.1} parent=1 // pred_fallthru
      _
    // Predicated region
    $region70: #{tpu_custom_call.1} parent=1 // pred_check
      _
    $region71: #{tpu_custom_call.1} parent=1 // pred_check_branch
      %497 = sbr.rel (0) target = $region73
    $region72: #{tpu_custom_call.1} parent=1 // pred_region
      %498 = dma.done [#allocation9], 16
    $region73: #{tpu_custom_call.1} parent=1 // pred_fallthru
      _
    %499 = sfence
    %500 = vsyncpa [#allocation5], 1
    %501 = vsyncpa [#allocation6], 1
    %502 = vsyncpa [#allocation9], 1

</llo_original>
